<compile_context>
chip_gen: v6e
topology: v6e:2x2x1
jax: 0.10.0
libtpu: 0.0.40
codegen_flags: <defaults>
</compile_context>

<pallas_src>
import functools

import jax
import jax.numpy as jnp
from jax.experimental import pallas as pl
from jax.experimental.pallas import tpu as pltpu


def _rce_kernel(x_ref, t_ref, out_ref, *, total_cols):
    """One tile: x_ref is (C, TN) logits, t_ref is (1, TN) int32 targets."""
    c, tn = x_ref.shape

    x = x_ref[...].astype(jnp.float32)                      # (C, TN), f32 math
    t = t_ref[...]                                           # (1, TN) int32

    # Stable softmax over the class (sublane) axis; batch stays lane-dense.
    m = jnp.max(x, axis=0, keepdims=True)                    # (1, TN)
    e = jnp.exp(x - m)                                        # (C, TN)
    z = jnp.sum(e, axis=0, keepdims=True)                     # (1, TN)
    # Upper clamp at 1.0 dropped: softmax <= 1, so it is a no-op.
    p = jnp.maximum(e * pl.reciprocal(z, approx=False), 1e-7)  # (C, TN)

    # loss_i = -sum_c clip(p)_c * log(clip(onehot)_c)
    #        = -log(1e-4) * sum_{c != target_i} clip(p)_c
    cls = jax.lax.broadcasted_iota(jnp.int32, (c, tn), 0)     # class id / sublane
    masked = jnp.where(cls != t, p, 0.0)                      # drop target class
    per_col = jnp.sum(masked, axis=0, keepdims=True)          # (1, TN)

    if total_cols % tn != 0:
        # Static guard: only emit the ragged-tail mask when N is not a
        # multiple of the tile width.  Pad columns may hold garbage (even
        # NaN from exp of junk); the select zeroes them out.
        col = pl.program_id(0) * tn + jax.lax.broadcasted_iota(
            jnp.int32, (1, tn), 1)
        per_col = jnp.where(col < total_cols, per_col, 0.0)

    neg_log_eps = -jnp.log(jnp.float32(1e-4))
    out_ref[...] = jnp.broadcast_to(
        neg_log_eps * jnp.sum(per_col), (1, 128)).astype(jnp.float32)


def rce_loss(x, target, num_classes=10, reduction='mean', block_cols=16384):
    """Pallas-backed RCELoss.forward.

    x: (N, C) float logits (f32 or bf16; fed to the kernel in native dtype).
    target: (N,) int class indices.
    block_cols: batch columns per grid step (multiple of 128).  16384 keeps
    double-buffered tiles ~1.5 MiB -- inside scoped-VMEM defaults on
    v5e/v6e/v7x; raise it (with vmem_limit_bytes) on v5e/v6e if step
    overhead dominates.
    """
    assert x.shape[-1] == num_classes
    # TODO(synk): reduction='none' would need a per-sample (N,) output path.
    assert reduction == 'mean'
    assert block_cols % 128 == 0
    N, C = x.shape

    # Lane-dense operand layout: batch on lanes, classes on sublanes.
    # TODO(synk): ideally the logits producer emits (C, N) directly (or this
    # loss is fused into it), removing this wrapper transpose entirely.
    x_cn = jnp.transpose(x)                               # (C, N), native dtype
    t_row = target.astype(jnp.int32).reshape(1, N)        # (1, N) lane-dense

    tn = N if N <= block_cols else block_cols             # mult of 128, or full
    num_tiles = pl.cdiv(N, tn)

    partials = pl.pallas_call(
        functools.partial(_rce_kernel, total_cols=N),
        out_shape=jax.ShapeDtypeStruct((1, 128 * num_tiles), jnp.float32),
        grid=(num_tiles,),
        in_specs=[
            pl.BlockSpec((C, tn), lambda i: (0, i)),       # logits tile (C, TN)
            pl.BlockSpec((1, tn), lambda i: (0, i)),       # targets (1, TN)
        ],
        out_specs=pl.BlockSpec((1, 128), lambda i: (0, i)),  # lane-dense partials
        compiler_params=pltpu.CompilerParams(
            dimension_semantics=("parallel",)),
    )(x_cn, t_row)

    total = jnp.sum(partials.reshape(num_tiles, 128)[:, 0])
    return total / N


def _rce_loss_ref(x, target, num_classes=10):
    """Pure-JAX reference mirroring the PyTorch module."""
    prob = jax.nn.softmax(x.astype(jnp.float32), axis=-1)
    prob = jnp.clip(prob, 1e-7, 1.0)
    one_hot = jax.nn.one_hot(target, num_classes, dtype=jnp.float32)
    one_hot = jnp.clip(one_hot, 1e-4, 1.0)
    loss = -jnp.sum(prob * jnp.log(one_hot), axis=-1)
    return jnp.mean(loss)


if __name__ == "__main__":
    key = jax.random.PRNGKey(0)
    kx, kt = jax.random.split(key)

    N, C = 300, 10                   # small batch, num_classes=10 (module default)
    x = jax.random.normal(kx, (N, C), dtype=jnp.float32) * 2.0
    target = jax.random.randint(kt, (N,), 0, C, dtype=jnp.int32)
    ref = _rce_loss_ref(x, target, num_classes=C)

    # Multi-tile ragged path: 128-col tiles -> 3 grid steps, last tile masked.
    loss = jax.block_until_ready(
        rce_loss(x, target, num_classes=C, block_cols=128))
    assert jnp.allclose(loss, ref, rtol=1e-5, atol=1e-5), (loss, ref)

    # Single full-array tile path (default block_cols, no tail mask emitted).
    loss_single = jax.block_until_ready(rce_loss(x, target, num_classes=C))
    assert jnp.allclose(loss_single, ref, rtol=1e-5, atol=1e-5), (loss_single, ref)

    # Native bf16 logits (no host upcast; math stays f32 in-kernel).
    x_bf16 = x.astype(jnp.bfloat16)
    ref_bf = _rce_loss_ref(x_bf16, target, num_classes=C)
    loss_bf = jax.block_until_ready(
        rce_loss(x_bf16, target, num_classes=C, block_cols=128))
    assert jnp.allclose(loss_bf, ref_bf, rtol=1e-5, atol=1e-5), (loss_bf, ref_bf)

    print("KERNEL_OK")
</pallas_src>

<mosaic_0001>
module attributes {stable_mosaic.version = 11 : i64} {
  func.func @_rce_kernel(%arg0: i32, %arg1: memref<10x128xf32, #tpu.memory_space<vmem>>, %arg2: memref<1x128xi32, #tpu.memory_space<vmem>>, %arg3: memref<1x128xf32, #tpu.memory_space<vmem>>) attributes {dimension_semantics = [#tpu.dimension_semantics<parallel>], iteration_bounds = array<i64: 3>, scalar_prefetch = 0 : i64, scratch_operands = 0 : i64, tpu.core_type = #tpu.core_type<tc>, window_params = [{transform_indices = @transform_0, window_bounds = array<i64: 10, 128>}, {transform_indices = @transform_1, window_bounds = array<i64: 1, 128>}, {transform_indices = @transform_2, window_bounds = array<i64: 1, 128>}]} {
    %c0 = arith.constant 0 : index
    %c0_0 = arith.constant 0 : index
    %0 = vector.load %arg1[%c0, %c0_0] : memref<10x128xf32, #tpu.memory_space<vmem>>, vector<10x128xf32>
    %c0_1 = arith.constant 0 : index
    %c0_2 = arith.constant 0 : index
    %1 = vector.load %arg2[%c0_1, %c0_2] : memref<1x128xi32, #tpu.memory_space<vmem>>, vector<1x128xi32>
    %cst = arith.constant dense<0xFF800000> : vector<128xf32>
    %2 = vector.multi_reduction <maximumf>, %0, %cst [0] : vector<10x128xf32> to vector<128xf32>
    %3 = vector.shape_cast %2 : vector<128xf32> to vector<1x128xf32>
    %4 = vector.broadcast %3 : vector<1x128xf32> to vector<10x128xf32>
    %5 = arith.subf %0, %4 : vector<10x128xf32>
    %6 = math.exp %5 : vector<10x128xf32>
    %cst_3 = arith.constant dense<0.000000e+00> : vector<128xf32>
    %7 = vector.multi_reduction <add>, %6, %cst_3 [0] : vector<10x128xf32> to vector<128xf32>
    %8 = vector.shape_cast %7 : vector<128xf32> to vector<1x128xf32>
    %9 = tpu.reciprocal %8 : vector<1x128xf32> -> vector<1x128xf32>
    %10 = vector.broadcast %9 : vector<1x128xf32> to vector<10x128xf32>
    %11 = arith.mulf %6, %10 : vector<10x128xf32>
    %cst_4 = arith.constant 1.000000e-07 : f32
    %12 = vector.broadcast %cst_4 : f32 to vector<10x128xf32>
    %13 = arith.maximumf %11, %12 : vector<10x128xf32>
    %14 = tpu.iota {dimensions = array<i32: 0>} : vector<10x128xi32>
    %15 = vector.broadcast %1 : vector<1x128xi32> to vector<10x128xi32>
    %16 = arith.cmpi ne, %14, %15 : vector<10x128xi32>
    %cst_5 = arith.constant 0.000000e+00 : f32
    %17 = vector.broadcast %cst_5 : f32 to vector<10x128xf32>
    %18 = arith.select %16, %13, %17 : vector<10x128xi1>, vector<10x128xf32>
    %cst_6 = arith.constant dense<0.000000e+00> : vector<128xf32>
    %19 = vector.multi_reduction <add>, %18, %cst_6 [0] : vector<10x128xf32> to vector<128xf32>
    %20 = vector.shape_cast %19 : vector<128xf32> to vector<1x128xf32>
    %c128_i32 = arith.constant 128 : i32
    %21 = arith.muli %arg0, %c128_i32 : i32
    %22 = tpu.iota {dimensions = array<i32: 1>} : vector<1x128xi32>
    %23 = vector.broadcast %21 : i32 to vector<1x128xi32>
    %24 = arith.addi %23, %22 : vector<1x128xi32>
    %c300_i32 = arith.constant 300 : i32
    %25 = vector.broadcast %c300_i32 : i32 to vector<1x128xi32>
    %26 = arith.cmpi slt, %24, %25 : vector<1x128xi32>
    %cst_7 = arith.constant 0.000000e+00 : f32
    %27 = vector.broadcast %cst_7 : f32 to vector<1x128xf32>
    %28 = arith.select %26, %20, %27 : vector<1x128xi1>, vector<1x128xf32>
    %cst_8 = arith.constant 9.99999974E-5 : f32
    %29 = math.log %cst_8 : f32
    %cst_9 = arith.constant 0.000000e+00 : f32
    %30 = arith.subf %cst_9, %29 : f32
    %31 = vector.shape_cast %28 : vector<1x128xf32> to vector<1x1x128xf32>
    %cst_10 = arith.constant dense<0.000000e+00> : vector<1xf32>
    %32 = vector.multi_reduction <add>, %31, %cst_10 [1, 2] : vector<1x1x128xf32> to vector<1xf32>
    %33 = vector.shape_cast %32 : vector<1xf32> to vector<1x1x1xf32>
    %34 = vector.extract %33[0, 0, 0] : f32 from vector<1x1x1xf32>
    %35 = arith.mulf %30, %34 : f32
    %36 = vector.broadcast %35 : f32 to vector<1x128xf32>
    %c0_11 = arith.constant 0 : index
    %c0_12 = arith.constant 0 : index
    %37 = vector.load %arg3[%c0_11, %c0_12] : memref<1x128xf32, #tpu.memory_space<vmem>>, vector<1x128xf32>
    tpu.vector_store %arg3[%c0_11, %c0_12], %36 {strides = array<i32>} : memref<1x128xf32, #tpu.memory_space<vmem>>, vector<1x128xf32>,
    return
  }
  func.func @transform_0(%arg0: i32) -> (i32, i32) {
    %c0_i32 = arith.constant 0 : i32
    %c0_i32_0 = arith.constant 0 : i32
    return %c0_i32, %arg0 : i32, i32
  }
  func.func @transform_1(%arg0: i32) -> (i32, i32) {
    %c0_i32 = arith.constant 0 : i32
    %c0_i32_0 = arith.constant 0 : i32
    return %c0_i32, %arg0 : i32, i32
  }
  func.func @transform_2(%arg0: i32) -> (i32, i32) {
    %c0_i32 = arith.constant 0 : i32
    %c0_i32_0 = arith.constant 0 : i32
    return %c0_i32, %arg0 : i32, i32
  }
}

</mosaic_0001>

<llo_original>
// kernel: tpu_custom_call.1
$region0: #{tpu_custom_call.1}
  #allocation0 [shape = 'u32[]', space=smem, size = 0x4, offset = 0x4, fixed_abs, tag = 'smem constant byte address 0x4 - core index']
  #allocation1 [shape = 'u32[144,128]{1,0:T(1,128)}', space=vmem, size = 0x12000, scoped, tag = 'internal scratch']
  %s0 = inlined_call_operand.hbm [shape: f32[10,300], index: 0, kind: input, shape index: {}]
  %s1 = inlined_call_operand.hbm [shape: s32[1,300], index: 1, kind: input, shape index: {}]
  %s2 = inlined_call_operand.hbm [shape: f32[1,384], index: 2, kind: output, shape index: {}]
  %s3 = sld [smem:[#allocation0]]
  $region49: #{tpu_custom_call.1} parent=0
    _
  %s5 = ssub.s32 1, %s3
  %s6 = scalar_select 0, %s5, %s3
  $region1: #{tpu_custom_call.1} parent=0
    #allocation2 [shape = 'u8[16384]{0}', space=vmem, size = 0x4000, scoped, tag = 'input window, operand 0']
    #allocation3 [shape = 's32[2]{0}', space=sflag, size = 0x8, scoped, tag = 'scoped memory for tpu_custom_call.1']
    #allocation4 [shape = 's32[2]{0}', space=sflag, size = 0x8, scoped, tag = 'scoped memory for tpu_custom_call.1']
    #allocation5 [shape = 'u8[1024]{0}', space=vmem, size = 0x400, scoped, tag = 'input window, operand 1']
    #allocation6 [shape = 's32[2]{0}', space=sflag, size = 0x8, scoped, tag = 'scoped memory for tpu_custom_call.1']
    #allocation7 [shape = 'u8[1024]{0}', space=vmem, size = 0x400, scoped, tag = 'output window, operand 0']
    %7 = vsyncpa [#allocation3], 0
    %s8 = scalar_lea.sflag [#allocation3], 1
    %9 = vsyncpa %s8, 0
    %10 = vsyncpa [#allocation6], 0
    %s11 = scalar_lea.sflag [#allocation6], 1
    %12 = vsyncpa %s11, 0
    %13 = vsyncpa [#allocation4], 0
    %s14 = scalar_lea.sflag [#allocation4], 1
    %15 = vsyncpa %s14, 0
    loop: start=0, step=1, limit=5
    $region2: #{tpu_custom_call.1} parent=1 // loop_pre_header
      _
    $region3: #{tpu_custom_call.1} parent=1 // loop_header
      %s17 = sphi 0, %s21
      %p18 = scmp.ge.s32.totalorder %s17, 5
      %s27 = sphi 0, %s29
      %s30 = sphi 0, %s27
      %s31 = sphi 0, %s30
      %s47 = sphi 0, %s31
      %s53 = sphi 0, %s55
      %s56 = sphi 0, %s53
      %s57 = sphi 0, %s56
      %s73 = sphi 0, %s57
      %s79 = sphi 0, %s81
      %s82 = sphi 0, %s79
      %s83 = sphi 0, %s82
      %s99 = sphi 0, %s83
    $region4: #{tpu_custom_call.1} parent=1 // loop_header_branch
      %20 = sbr.rel (%p18) target = $region8
    $region5: #{tpu_custom_call.1} parent=1 // loop_body
      %s22 = ssub.s32 %s17, 1
      %s23 = ssub.s32 %s17, 2
      %s24 = sadd.s32 %s17, 1
      %s25 = ssub.s32 %s17, %s24
      %p26 = scmp.eq.s32.totalorder %s25, 0
      %s28 = sadd.s32 %s27, 1
      %s29 = scalar_select %p26, %s27, %s28
      %p32 = pneg %p26
      %p33 = scmp.eq.s32.totalorder %s17, 2
      %p34 = por %p32, %p33
      %p35 = scmp.ne.s32.totalorder %s27, %s30
      %p36 = scmp.eq.s32.totalorder %s17, 0
      %p37 = por %p35, %p36
      %p38 = scmp.ne.s32.totalorder %s27, %s30
      %p39 = scmp.eq.s32.totalorder %s22, 2
      %p40 = por %p38, %p39
      %p41 = scmp.ne.s32.totalorder %s30, %s31
      %p42 = scmp.eq.s32.totalorder %s22, 0
      %p43 = por %p41, %p42
      %p44 = scmp.ne.s32.totalorder %s30, %s31
      %p45 = scmp.eq.s32.totalorder %s23, 2
      %p46 = por %p44, %p45
      %p48 = scmp.ne.s32.totalorder %s31, %s47
      %p49 = scmp.eq.s32.totalorder %s23, 0
      %p50 = por %p48, %p49
      %s51 = ssub.s32 %s17, %s24
      %p52 = scmp.eq.s32.totalorder %s51, 0
      %s54 = sadd.s32 %s53, 1
      %s55 = scalar_select %p52, %s53, %s54
      %p58 = pneg %p52
      %p59 = scmp.eq.s32.totalorder %s17, 2
      %p60 = por %p58, %p59
      %p61 = scmp.ne.s32.totalorder %s53, %s56
      %p62 = scmp.eq.s32.totalorder %s17, 0
      %p63 = por %p61, %p62
      %p64 = scmp.ne.s32.totalorder %s53, %s56
      %p65 = scmp.eq.s32.totalorder %s22, 2
      %p66 = por %p64, %p65
      %p67 = scmp.ne.s32.totalorder %s56, %s57
      %p68 = scmp.eq.s32.totalorder %s22, 0
      %p69 = por %p67, %p68
      %p70 = scmp.ne.s32.totalorder %s56, %s57
      %p71 = scmp.eq.s32.totalorder %s23, 2
      %p72 = por %p70, %p71
      %p74 = scmp.ne.s32.totalorder %s57, %s73
      %p75 = scmp.eq.s32.totalorder %s23, 0
      %p76 = por %p74, %p75
      %s77 = ssub.s32 %s17, %s24
      %p78 = scmp.eq.s32.totalorder %s77, 0
      %s80 = sadd.s32 %s79, 1
      %s81 = scalar_select %p78, %s79, %s80
      %p84 = pneg %p78
      %p85 = scmp.eq.s32.totalorder %s17, 2
      %p86 = por %p84, %p85
      %p87 = scmp.ne.s32.totalorder %s79, %s82
      %p88 = scmp.eq.s32.totalorder %s17, 0
      %p89 = por %p87, %p88
      %p90 = scmp.ne.s32.totalorder %s79, %s82
      %p91 = scmp.eq.s32.totalorder %s22, 2
      %p92 = por %p90, %p91
      %p93 = scmp.ne.s32.totalorder %s82, %s83
      %p94 = scmp.eq.s32.totalorder %s22, 0
      %p95 = por %p93, %p94
      %p96 = scmp.ne.s32.totalorder %s82, %s83
      %p97 = scmp.eq.s32.totalorder %s23, 2
      %p98 = por %p96, %p97
      %p100 = scmp.ne.s32.totalorder %s83, %s99
      %p101 = scmp.eq.s32.totalorder %s23, 0
      %p102 = por %p100, %p101
      %p103 = scmp.le.s32.totalorder 1, %s17
      %p104 = scmp.lt.s32.totalorder %s17, 4
      %p105 = pnand %p103, %p104
      %p106 = pneg %p105
      // Predicated region
      $region9: #{tpu_custom_call.1} parent=5 // pred_check
        _
      $region10: #{tpu_custom_call.1} parent=5 // pred_check_branch
        %108 = sbr.rel (%p105) target = $region12
      $region11: #{tpu_custom_call.1} parent=5 // pred_region
        %s109 = ssub.s32 %s17, 1
      $region12: #{tpu_custom_call.1} parent=5 // pred_fallthru
        _
      %p110 = scmp.lt.s32.totalorder %s17, 3
      // Predicated region
      $region13: #{tpu_custom_call.1} parent=5 // pred_check
        %p111 = pneg %p110
      $region14: #{tpu_custom_call.1} parent=5 // pred_check_branch
        %113 = sbr.rel (%p111) target = $region16
      $region15: #{tpu_custom_call.1} parent=5 // pred_region
        // Predicated region
        $region17: #{tpu_custom_call.1} parent=15 // pred_check
          %p114 = pneg %p37
        $region18: #{tpu_custom_call.1} parent=15 // pred_check_branch
          %116 = sbr.rel (%p114) target = $region20
        $region19: #{tpu_custom_call.1} parent=15 // pred_region
          %s117 = sand.u32 %s27, 1
          %s118 = scalar_lea.sflag [#allocation3], %s117
          %s119 = sand.u32 %s27, 1
          %s120 = smul.addr %s119, 16
          %s121 = scalar_lea.vmem [#allocation2], %s120
          %s123 = ssub.s32 256, 256
          %124 = vsyncadd %s118, %s123
          %s125 = smul.addr %s17, 128
          %s126 = scalar_lea.hbm %s0, %s125
          %s127 = sshll.u32 %s121, 4
          %s128 = int_to_ptr.vmem [resolvable:$true] %s127
          %133 = dma.hbm_to_vmem [thread:$0]  %s126, 256, %s128, %s118, 384, 128, 8
        $region20: #{tpu_custom_call.1} parent=15 // pred_fallthru
          _
        // Predicated region
        $region21: #{tpu_custom_call.1} parent=15 // pred_check
          %p134 = pneg %p63
        $region22: #{tpu_custom_call.1} parent=15 // pred_check_branch
          %136 = sbr.rel (%p134) target = $region24
        $region23: #{tpu_custom_call.1} parent=15 // pred_region
          %s137 = sand.u32 %s53, 1
          %s138 = scalar_lea.sflag [#allocation6], %s137
          %s139 = sand.u32 %s53, 1
          %s140 = scalar_lea.vmem [#allocation5], %s139
          %s142 = ssub.s32 16, 16
          %143 = vsyncadd %s138, %s142
          %s144 = smul.addr %s17, 16
          %s145 = scalar_lea.hbm %s1, %s144
          %s147 = sshll.u32 %s140, 4
          %s148 = int_to_ptr.vmem [resolvable:$true] %s147
          %150 = dma.hbm_to_vmem [thread:$0]  %s145, 16, %s148, %s138
        $region24: #{tpu_custom_call.1} parent=15 // pred_fallthru
          _
      $region16: #{tpu_custom_call.1} parent=5 // pred_fallthru
        _
      %p151 = scmp.le.s32.totalorder 1, %s17
      %p152 = scmp.lt.s32.totalorder %s17, 4
      %p153 = pnand %p151, %p152
      %p154 = pneg %p153
      // Predicated region
      $region25: #{tpu_custom_call.1} parent=5 // pred_check
        _
      $region26: #{tpu_custom_call.1} parent=5 // pred_check_branch
        %156 = sbr.rel (%p153) target = $region28
      $region27: #{tpu_custom_call.1} parent=5 // pred_region
        %s157 = ssub.s32 %s17, 1
        %s158 = sand.u32 %s30, 1
        %s159 = scalar_lea.sflag [#allocation3], %s158
        %s160 = sand.u32 %s30, 1
        %s161 = smul.addr %s160, 16
        %s162 = scalar_lea.vmem [#allocation2], %s161
        // Predicated region
        $region29: #{tpu_custom_call.1} parent=27 // pred_check
          %p163 = pneg %p43
        $region30: #{tpu_custom_call.1} parent=27 // pred_check_branch
          %165 = sbr.rel (%p163) target = $region32
        $region31: #{tpu_custom_call.1} parent=27 // pred_region
          %166 = dma.done %s159, 256
        $region32: #{tpu_custom_call.1} parent=27 // pred_fallthru
          _
        %s167 = sand.u32 %s56, 1
        %s168 = scalar_lea.sflag [#allocation6], %s167
        %s169 = sand.u32 %s56, 1
        %s170 = scalar_lea.vmem [#allocation5], %s169
        // Predicated region
        $region33: #{tpu_custom_call.1} parent=27 // pred_check
          %p171 = pneg %p69
        $region34: #{tpu_custom_call.1} parent=27 // pred_check_branch
          %173 = sbr.rel (%p171) target = $region36
        $region35: #{tpu_custom_call.1} parent=27 // pred_region
          %174 = dma.done %s168, 16
        $region36: #{tpu_custom_call.1} parent=27 // pred_fallthru
          _
        %s175 = sand.u32 %s30, 1
        %s176 = scalar_lea.sflag [#allocation3], %s175
        %s177 = sand.u32 %s30, 1
        %s178 = smul.addr %s177, 16
        %s179 = scalar_lea.vmem [#allocation2], %s178
        %p180 = pneg %p43
        %p181 = pneg %p40
        %s182 = sand.u32 %s56, 1
        %s183 = scalar_lea.sflag [#allocation6], %s182
        %s184 = sand.u32 %s56, 1
        %s185 = scalar_lea.vmem [#allocation5], %s184
        %p186 = pneg %p69
        %p187 = pneg %p66
        %p188 = pneg %p95
        %p189 = pneg %p92
        %s190 = sand.u32 %s82, 1
        %s191 = scalar_lea.sflag [#allocation4], %s190
        %s192 = sand.u32 %s82, 1
        %s193 = scalar_lea.vmem [#allocation7], %s192
        %v194 = vld [vmem:[%s162] sm:$0xff]
        %v195 = vld [vmem:[%s162 + $0x8] sm:$0x3]
        %v196 = vld [vmem:[%s170] sm:$0x1]
        %vm197 = vcmask 1041408
        %v198 = vsel %vm197, %v195, -inf
        %v199 = vmax.f32 %v194, %v198
        %v200 = vrot.slane %v199, 4
        %v201 = vmax.f32 %v199, %v200
        %v202 = vrot.slane %v201, 2
        %v203 = vmax.f32 %v201, %v202
        %v204 = vrot.slane %v203, 1
        %v205 = vmax.f32 %v203, %v204
        %v206 = vsub.f32 %v194, %v205
        %v207 = vsub.f32 %v195, %v205
        %v208 = vmul.f32 %v206, 1.442695
        %v209 = vpow.pop %v208
        %v210 = vmul.f32 %v207, 1.442695
        %v211 = vpow.pop %v210
        %v212 = vsel %vm197, %v211, 0.0
        %v213 = vadd.f32 %v209, %v212
        %v214 = vrot.slane %v213, 4
        %v215 = vadd.f32 %v213, %v214
        %v216 = vrot.slane %v215, 2
        %v217 = vadd.f32 %v215, %v216
        %v218 = vrot.slane %v217, 1
        %v219 = vadd.f32 %v217, %v218
        %v220 = vrcp.pop %v219
        %v221 = vmul.f32 %v209, %v220
        %v222 = vmul.f32 %v211, %v220
        %v223 = vmax.f32 %v221, 1e-07
        %v224 = vmax.f32 %v222, 1e-07
        %v225 = vlaneseq
        %v226 = vshrl.u32 %v225, 7
        %v227 = vadd.s32 %v226, 8
        %v228 = vlaneseq
        %v229 = vshrl.u32 %v228, 7
        %v230 = vsub.s32 0, %v229
        %v231 = vrot.slane %v196, %v230
        %vm232 = vcmp.ne.s32.totalorder %v226, %v231
        %vm233 = vcmp.ne.s32.totalorder %v227, %v231
        %v234 = vsel %vm232, %v223, 0.0
        %v235 = vsel %vm233, %v224, 0.0
        %v236 = vsel %vm197, %v235, 0.0
        %v237 = vadd.f32 %v234, %v236
        %v238 = vrot.slane %v237, 4
        %v239 = vadd.f32 %v237, %v238
        %v240 = vrot.slane %v239, 2
        %v241 = vadd.f32 %v239, %v240
        %v242 = vrot.slane %v241, 1
        %v243 = vadd.f32 %v241, %v242
        %s244 = smul.u32 %s22, 128
        %v245 = vlaneseq
        %v246 = vand.u32 %v245, 127
        %v247 = vstv %s244
        %v248 = vadd.s32 %v247, %v246
        %vm249 = vcmp.lt.s32.totalorder %v248, 300
        %v250 = vsel %vm249, %v243, 0.0
        %vm251 = vcmask 1040384
        %v252 = vsel %vm251, %v250, 0.0
        %253 = vadd.xlane.f32.xlu0 %v252
        %v254 = vpop.xlane.xlu0 %253
        %v255 = vrot.slane %v254, 4
        %v256 = vadd.f32 %v254, %v255
        %v257 = vrot.slane %v256, 2
        %v258 = vadd.f32 %v256, %v257
        %v259 = vrot.slane %v258, 1
        %v260 = vadd.f32 %v258, %v259
        %s261 = vtos %v260
        %s262 = smul.f32 %s261, 9.2103405
        %v263 = vstv %s262
        %264 = vst [vmem:[%s193] sm:$0x1] %v263
        %s265 = sand.u32 %s82, 1
        %s266 = scalar_lea.sflag [#allocation4], %s265
        %s267 = sand.u32 %s82, 1
        %s268 = scalar_lea.vmem [#allocation7], %s267
        // Predicated region
        $region37: #{tpu_custom_call.1} parent=27 // pred_check
          %p269 = pneg %p92
        $region38: #{tpu_custom_call.1} parent=27 // pred_check_branch
          %271 = sbr.rel (%p269) target = $region40
        $region39: #{tpu_custom_call.1} parent=27 // pred_region
          %s273 = ssub.s32 16, 16
          %274 = vsyncadd %s266, %s273
          %s275 = smul.addr %s22, 16
          %s276 = scalar_lea.hbm %s2, %s275
          %s278 = sshll.u32 %s268, 4
          %s279 = int_to_ptr.vmem [resolvable:$true] %s278
          %281 = dma.vmem_to_hbm [thread:$0]  %s279, 16, %s276, %s266
        $region40: #{tpu_custom_call.1} parent=27 // pred_fallthru
          _
      $region28: #{tpu_custom_call.1} parent=5 // pred_fallthru
        _
      %p282 = scmp.le.s32.totalorder 2, %s17
      // Predicated region
      $region41: #{tpu_custom_call.1} parent=5 // pred_check
        %p283 = pneg %p282
      $region42: #{tpu_custom_call.1} parent=5 // pred_check_branch
        %285 = sbr.rel (%p283) target = $region44
      $region43: #{tpu_custom_call.1} parent=5 // pred_region
        %s286 = ssub.s32 %s17, 2
        // Predicated region
        $region45: #{tpu_custom_call.1} parent=43 // pred_check
          %p287 = pneg %p98
        $region46: #{tpu_custom_call.1} parent=43 // pred_check_branch
          %289 = sbr.rel (%p287) target = $region48
        $region47: #{tpu_custom_call.1} parent=43 // pred_region
          %s290 = sand.u32 %s83, 1
          %s291 = scalar_lea.sflag [#allocation4], %s290
          %s292 = sand.u32 %s83, 1
          %s293 = scalar_lea.vmem [#allocation7], %s292
          %294 = dma.done %s291, 16
        $region48: #{tpu_custom_call.1} parent=43 // pred_fallthru
          _
      $region44: #{tpu_custom_call.1} parent=5 // pred_fallthru
        _
    $region6: #{tpu_custom_call.1} parent=1 // loop_footer
      %s21 = sadd.s32 1, %s17
    $region7: #{tpu_custom_call.1} parent=1 // loop_footer_branch
      %16 = sbr.rel target = $region3
    $region8: #{tpu_custom_call.1} parent=1 // loop_exit
      _
    %295 = vsyncpa [#allocation3], 1
    %s296 = scalar_lea.sflag [#allocation3], 1
    %297 = vsyncpa %s296, 1
    %298 = vsyncpa [#allocation6], 1
    %s299 = scalar_lea.sflag [#allocation6], 1
    %300 = vsyncpa %s299, 1
    %301 = vsyncpa [#allocation4], 1
    %s302 = scalar_lea.sflag [#allocation4], 1
    %303 = vsyncpa %s302, 1

</llo_original>
